<compile_context>
chip_gen: v7x
topology: tpu7x:2x2x1
jax: 0.10.0
libtpu: 0.0.40
codegen_flags: <defaults>
</compile_context>

<pallas_src>
import jax
import jax.numpy as jnp
from jax.experimental import pallas as pl
from jax.experimental.pallas import tpu as pltpu

_LANES = 128
_TARGET_BLOCK_BYTES = 4 << 20   # ~4 MiB per (f32) array per grid step
_VMEM_LIMIT_BYTES = 48 << 20    # 4 arrays x 2 buffers x 4 MiB ~= 32 MiB < 48 MiB


def _mse_loss_kernel(pred_ref, tgt_ref, mask_ref, out_ref):
    out_dtype = out_ref.dtype
    res = pred_ref[...].astype(out_dtype) - tgt_ref[...].astype(out_dtype)
    out_ref[...] = mask_ref[...].astype(out_dtype) * res * res


def _pick_block_rows(rows, cols, out_dtype):
    itemsize = jnp.dtype(out_dtype).itemsize
    block_rows = _TARGET_BLOCK_BYTES // (cols * itemsize)
    # Multiple of 32 sublanes: legal packing for f32 (8), bf16 (16), int8 (32).
    block_rows = max(32, (block_rows // 32) * 32)
    if rows <= block_rows:
        # Single step: use the full array extent (always a legal block dim).
        return rows
    return block_rows


def _mse_loss_2d(pred2d, tgt2d, mask2d, out_dtype):
    rows, cols = pred2d.shape
    block_rows = _pick_block_rows(rows, cols, out_dtype)
    grid = (pl.cdiv(rows, block_rows),)

    def spec():
        return pl.BlockSpec((block_rows, cols), lambda i: (i, 0))

    return pl.pallas_call(
        _mse_loss_kernel,
        out_shape=jax.ShapeDtypeStruct((rows, cols), out_dtype),
        grid_spec=pltpu.PrefetchScalarGridSpec(
            num_scalar_prefetch=0,
            grid=grid,
            in_specs=[spec(), spec(), spec()],
            out_specs=spec(),
        ),
        compiler_params=pltpu.CompilerParams(
            # "parallel" shards this grid axis across TensorCores on
            # multi-TC chips (v7x); no effect on single-TC v5e/v6e.
            dimension_semantics=("parallel",),
            vmem_limit_bytes=_VMEM_LIMIT_BYTES,
        ),
    )(pred2d, tgt2d, mask2d)


def _mse_tail_jnp(pred, tgt, mask, out_dtype):
    # Tiny (<128 elem) remainder computed in plain JAX, mirroring the kernel
    # math exactly (cast -> sub -> square -> mask-mul in out_dtype).
    res = pred.astype(out_dtype) - tgt.astype(out_dtype)
    return mask.astype(out_dtype) * res * res


def mse_loss_pallas(prediction, target, mask):
    """Elementwise mask * (prediction - target)**2, same shape as inputs.

    Prefer passing bool/int8 masks: they stay 1 byte/elem in HBM and are
    upcast for free inside the kernel.
    """
    orig_shape = prediction.shape
    out_dtype = jnp.result_type(prediction.dtype, target.dtype, mask.dtype)

    # Keep integer masks narrow in HBM (upcast happens inside the kernel);
    # bool is passed as int8 to keep the ref layout simple.
    if mask.dtype == jnp.bool_:
        mask = mask.astype(jnp.int8)

    n = prediction.size
    rem = n % _LANES

    if rem == 0:
        # Free (layout-preserving) reshape into a lane-dense 2-D slab; the
        # kernel is the only HBM pass over the data.
        rows = n // _LANES

        def view(x):
            return x.reshape(rows, _LANES)

        out2d = _mse_loss_2d(view(prediction), view(target), view(mask), out_dtype)
        return out2d.reshape(orig_shape)

    head = n - rem
    if head == 0:
        # Entire tensor is smaller than one lane row; no kernel launch needed.
        return _mse_tail_jnp(prediction, target, mask, out_dtype).reshape(orig_shape)

    # Unaligned path: kernel on the aligned prefix, plain jnp on the <128-elem
    # tail, then stitch.  Avoids padding/copying all three full inputs.
    pflat = prediction.reshape(-1)
    tflat = target.reshape(-1)
    mflat = mask.reshape(-1)
    rows = head // _LANES

    out_head = _mse_loss_2d(
        pflat[:head].reshape(rows, _LANES),
        tflat[:head].reshape(rows, _LANES),
        mflat[:head].reshape(rows, _LANES),
        out_dtype,
    ).reshape(-1)
    out_tail = _mse_tail_jnp(pflat[head:], tflat[head:], mflat[head:], out_dtype)
    return jnp.concatenate([out_head, out_tail]).reshape(orig_shape)


if __name__ == "__main__":
    key = jax.random.PRNGKey(0)
    k1, k2, k3 = jax.random.split(key, 3)

    # 1) Small NCHW-like shape (aligned fast path), float mask.
    shape = (2, 4, 16, 16)
    prediction = jax.random.normal(k1, shape, dtype=jnp.float32)
    target = jax.random.normal(k2, shape, dtype=jnp.float32)
    mask = (jax.random.uniform(k3, shape) > 0.3).astype(jnp.float32)

    out = jax.block_until_ready(mse_loss_pallas(prediction, target, mask))
    ref = mask * (prediction - target) ** 2
    assert out.shape == shape
    assert out.dtype == ref.dtype
    assert jnp.allclose(out, ref, atol=1e-6, rtol=1e-6)

    # 2) Tiny, non-128-multiple size (< 128 elems -> pure jnp tail), int8 mask.
    shape2 = (3, 5, 7)
    p2 = jax.random.normal(k1, shape2, dtype=jnp.float32)
    t2 = jax.random.normal(k2, shape2, dtype=jnp.float32)
    m2 = (jax.random.uniform(k3, shape2) > 0.5).astype(jnp.int8)
    out2 = jax.block_until_ready(mse_loss_pallas(p2, t2, m2))
    ref2 = m2.astype(jnp.float32) * (p2 - t2) ** 2
    assert jnp.allclose(out2, ref2, atol=1e-6, rtol=1e-6)

    # 3) Non-128-multiple with an aligned prefix (kernel + jnp tail stitch),
    #    bool mask (kept narrow as int8 in HBM).
    shape3 = (5, 100)  # 500 elements = 384 (kernel) + 116 (tail)
    p3 = jax.random.normal(k1, shape3, dtype=jnp.float32)
    t3 = jax.random.normal(k2, shape3, dtype=jnp.float32)
    m3 = jax.random.uniform(k3, shape3) > 0.5
    out3 = jax.block_until_ready(mse_loss_pallas(p3, t3, m3))
    ref3 = m3.astype(jnp.float32) * (p3 - t3) ** 2
    assert out3.shape == shape3
    assert jnp.allclose(out3, ref3, atol=1e-6, rtol=1e-6)

    print("KERNEL_OK")
</pallas_src>

<mosaic_0001>
module attributes {stable_mosaic.version = 11 : i64} {
  func.func @_mse_loss_kernel(%arg0: i32, %arg1: memref<16x128xf32, #tpu.memory_space<vmem>>, %arg2: memref<16x128xf32, #tpu.memory_space<vmem>>, %arg3: memref<16x128xf32, #tpu.memory_space<vmem>>, %arg4: memref<16x128xf32, #tpu.memory_space<vmem>>) attributes {dimension_semantics = [#tpu.dimension_semantics<parallel>], iteration_bounds = array<i64: 1>, scalar_prefetch = 0 : i64, scratch_operands = 0 : i64, tpu.core_type = #tpu.core_type<tc>, window_params = [{transform_indices = @transform_0, window_bounds = array<i64: 16, 128>}, {transform_indices = @transform_1, window_bounds = array<i64: 16, 128>}, {transform_indices = @transform_2, window_bounds = array<i64: 16, 128>}, {transform_indices = @transform_3, window_bounds = array<i64: 16, 128>}]} {
    %c0 = arith.constant 0 : index
    %c0_0 = arith.constant 0 : index
    %0 = vector.load %arg1[%c0, %c0_0] : memref<16x128xf32, #tpu.memory_space<vmem>>, vector<16x128xf32>
    %c0_1 = arith.constant 0 : index
    %c0_2 = arith.constant 0 : index
    %1 = vector.load %arg2[%c0_1, %c0_2] : memref<16x128xf32, #tpu.memory_space<vmem>>, vector<16x128xf32>
    %2 = arith.subf %0, %1 : vector<16x128xf32>
    %c0_3 = arith.constant 0 : index
    %c0_4 = arith.constant 0 : index
    %3 = vector.load %arg3[%c0_3, %c0_4] : memref<16x128xf32, #tpu.memory_space<vmem>>, vector<16x128xf32>
    %4 = arith.mulf %3, %2 : vector<16x128xf32>
    %5 = arith.mulf %4, %2 : vector<16x128xf32>
    %c0_5 = arith.constant 0 : index
    %c0_6 = arith.constant 0 : index
    %6 = vector.load %arg4[%c0_5, %c0_6] : memref<16x128xf32, #tpu.memory_space<vmem>>, vector<16x128xf32>
    tpu.vector_store %arg4[%c0_5, %c0_6], %5 {strides = array<i32>} : memref<16x128xf32, #tpu.memory_space<vmem>>, vector<16x128xf32>,
    return
  }
  func.func @transform_0(%arg0: i32) -> (i32, i32) {
    %c0_i32 = arith.constant 0 : i32
    %c0_i32_0 = arith.constant 0 : i32
    return %arg0, %c0_i32 : i32, i32
  }
  func.func @transform_1(%arg0: i32) -> (i32, i32) {
    %c0_i32 = arith.constant 0 : i32
    %c0_i32_0 = arith.constant 0 : i32
    return %arg0, %c0_i32 : i32, i32
  }
  func.func @transform_2(%arg0: i32) -> (i32, i32) {
    %c0_i32 = arith.constant 0 : i32
    %c0_i32_0 = arith.constant 0 : i32
    return %arg0, %c0_i32 : i32, i32
  }
  func.func @transform_3(%arg0: i32) -> (i32, i32) {
    %c0_i32 = arith.constant 0 : i32
    %c0_i32_0 = arith.constant 0 : i32
    return %arg0, %c0_i32 : i32, i32
  }
}

</mosaic_0001>

<llo_original>
// kernel: tpu_custom_call.1
$region0: #{tpu_custom_call.1}
  #allocation0 [shape = 'u32[]', space=smem, size = 0x4, offset = 0x4, fixed_abs, tag = 'smem constant byte address 0x4 - core index']
  #allocation1 [shape = 'u32[144,128]{1,0:T(1,128)}', space=vmem, size = 0x12000, scoped, tag = 'internal scratch']
  %s0 = inlined_call_operand.hbm [shape: f32[16,128], index: 0, kind: input, shape index: {}]
  %s1 = inlined_call_operand.hbm [shape: f32[16,128], index: 1, kind: input, shape index: {}]
  %s2 = inlined_call_operand.hbm [shape: f32[16,128], index: 2, kind: input, shape index: {}]
  %s3 = inlined_call_operand.hbm [shape: f32[16,128], index: 3, kind: output, shape index: {}]
  %s4 = sld [smem:[#allocation0]]
  $region34: #{tpu_custom_call.1} parent=0
    _
  %s6 = ssub.s32 1, %s4
  %s7 = scalar_select 0, %s6, %s4
  $region1: #{tpu_custom_call.1} parent=0
    #allocation2 [shape = 'u8[8192]{0}', space=vmem, size = 0x2000, scoped, tag = 'input window, operand 0, single buffered']
    #allocation3 [shape = 's32[1]{0}', space=sflag, size = 0x4, scoped, tag = 'scoped memory for tpu_custom_call.1']
    #allocation4 [shape = 's32[1]{0}', space=sflag, size = 0x4, scoped, tag = 'scoped memory for tpu_custom_call.1']
    #allocation5 [shape = 'u8[8192]{0}', space=vmem, size = 0x2000, scoped, tag = 'input window, operand 1, single buffered']
    #allocation6 [shape = 's32[1]{0}', space=sflag, size = 0x4, scoped, tag = 'scoped memory for tpu_custom_call.1']
    #allocation7 [shape = 'u8[8192]{0}', space=vmem, size = 0x2000, scoped, tag = 'input window, operand 2, single buffered']
    #allocation8 [shape = 'u8[8192]{0}', space=vmem, size = 0x2000, scoped, tag = 'output window, operand 0, single buffered']
    %8 = vsyncpa [#allocation3], 0
    %9 = vsyncpa [#allocation6], 0
    %10 = vsyncpa [#allocation4], 0
    // Predicated region
    $region2: #{tpu_custom_call.1} parent=1 // pred_check
      _
    $region3: #{tpu_custom_call.1} parent=1 // pred_check_branch
      %12 = sbr.rel (0) target = $region5
    $region4: #{tpu_custom_call.1} parent=1 // pred_region
      %s14 = ssub.s32 256, 256
      %15 = vsyncadd [#allocation3], %s14
      %s16 = sshll.u32 [#allocation2], 4
      %s17 = int_to_ptr.vmem [resolvable:$true] %s16
      %22 = dma.hbm_to_vmem [thread:$0]  %s0, 256, %s17, [#allocation3], 128, 128, 8
    $region5: #{tpu_custom_call.1} parent=1 // pred_fallthru
      _
    // Predicated region
    $region6: #{tpu_custom_call.1} parent=1 // pred_check
      _
    $region7: #{tpu_custom_call.1} parent=1 // pred_check_branch
      %24 = sbr.rel (0) target = $region9
    $region8: #{tpu_custom_call.1} parent=1 // pred_region
      %s26 = ssub.s32 256, 256
      %27 = vsyncadd [#allocation6], %s26
      %s28 = sshll.u32 [#allocation5], 4
      %s29 = int_to_ptr.vmem [resolvable:$true] %s28
      %34 = dma.hbm_to_vmem [thread:$0]  %s1, 256, %s29, [#allocation6], 128, 128, 8
    $region9: #{tpu_custom_call.1} parent=1 // pred_fallthru
      _
    // Predicated region
    $region10: #{tpu_custom_call.1} parent=1 // pred_check
      _
    $region11: #{tpu_custom_call.1} parent=1 // pred_check_branch
      %36 = sbr.rel (0) target = $region13
    $region12: #{tpu_custom_call.1} parent=1 // pred_region
      %s38 = ssub.s32 256, 256
      %39 = vsyncadd [#allocation6], %s38
      %s40 = sshll.u32 [#allocation7], 4
      %s41 = int_to_ptr.vmem [resolvable:$true] %s40
      %46 = dma.hbm_to_vmem [thread:$0]  %s2, 256, %s41, [#allocation6], 128, 128, 8
    $region13: #{tpu_custom_call.1} parent=1 // pred_fallthru
      _
    // Predicated region
    $region14: #{tpu_custom_call.1} parent=1 // pred_check
      _
    $region15: #{tpu_custom_call.1} parent=1 // pred_check_branch
      %48 = sbr.rel (0) target = $region17
    $region16: #{tpu_custom_call.1} parent=1 // pred_region
      %49 = dma.done [#allocation3], 256
    $region17: #{tpu_custom_call.1} parent=1 // pred_fallthru
      _
    // Predicated region
    $region18: #{tpu_custom_call.1} parent=1 // pred_check
      _
    $region19: #{tpu_custom_call.1} parent=1 // pred_check_branch
      %51 = sbr.rel (0) target = $region21
    $region20: #{tpu_custom_call.1} parent=1 // pred_region
      %52 = dma.done [#allocation6], 256
    $region21: #{tpu_custom_call.1} parent=1 // pred_fallthru
      _
    // Predicated region
    $region22: #{tpu_custom_call.1} parent=1 // pred_check
      _
    $region23: #{tpu_custom_call.1} parent=1 // pred_check_branch
      %54 = sbr.rel (0) target = $region25
    $region24: #{tpu_custom_call.1} parent=1 // pred_region
      %55 = dma.done [#allocation6], 256
    $region25: #{tpu_custom_call.1} parent=1 // pred_fallthru
      _
    %v56 = vld [vmem:[#allocation2] sm:$0xff]
    %v57 = vld [vmem:[#allocation2 + $0x8] sm:$0xff]
    %v58 = vld [vmem:[#allocation5] sm:$0xff]
    %v59 = vld [vmem:[#allocation5 + $0x8] sm:$0xff]
    %v60 = vsub.f32 %v56, %v58
    %v61 = vsub.f32 %v57, %v59
    %v62 = vld [vmem:[#allocation7] sm:$0xff]
    %v63 = vld [vmem:[#allocation7 + $0x8] sm:$0xff]
    %v64 = vmul.f32 %v62, %v60
    %v65 = vmul.f32 %v63, %v61
    %v66 = vmul.f32 %v64, %v60
    %v67 = vmul.f32 %v65, %v61
    %68 = vst [vmem:[#allocation8] sm:$0xff] %v66
    %69 = vst [vmem:[#allocation8 + $0x8] sm:$0xff] %v67
    // Predicated region
    $region26: #{tpu_custom_call.1} parent=1 // pred_check
      _
    $region27: #{tpu_custom_call.1} parent=1 // pred_check_branch
      %71 = sbr.rel (0) target = $region29
    $region28: #{tpu_custom_call.1} parent=1 // pred_region
      %s73 = ssub.s32 256, 256
      %74 = vsyncadd [#allocation4], %s73
      %s75 = sshll.u32 [#allocation8], 4
      %s76 = int_to_ptr.vmem [resolvable:$true] %s75
      %81 = dma.vmem_to_hbm [thread:$0]  %s76, 256, %s3, [#allocation4], 128, 128, 8
    $region29: #{tpu_custom_call.1} parent=1 // pred_fallthru
      _
    // Predicated region
    $region30: #{tpu_custom_call.1} parent=1 // pred_check
      _
    $region31: #{tpu_custom_call.1} parent=1 // pred_check_branch
      %83 = sbr.rel (0) target = $region33
    $region32: #{tpu_custom_call.1} parent=1 // pred_region
      %84 = dma.done [#allocation4], 256
    $region33: #{tpu_custom_call.1} parent=1 // pred_fallthru
      _
    %85 = vsyncpa [#allocation3], 1
    %86 = vsyncpa [#allocation6], 1
    %87 = vsyncpa [#allocation4], 1

</llo_original>
